<compile_context>
chip_gen: v7x
topology: tpu7x:2x2x1
jax: 0.10.0
libtpu: 0.0.40
codegen_flags: <defaults>
</compile_context>

<pallas_src>
import jax
import jax.numpy as jnp
from jax.experimental import pallas as pl
from jax.experimental.pallas import tpu as pltpu


def _round_up(v, m):
    return (v + m - 1) // m * m


def mlp_softmax_kernel(x_ref, w1_ref, b1_ref, w2_ref, b2_ref, o_ref):
    # Linear 1 (bf16 operands, f32 accumulate on the MXU)
    h = jnp.dot(x_ref[...], w1_ref[...], preferred_element_type=jnp.float32)
    h = h + b1_ref[...]
    # LeakyReLU (torch default negative_slope = 0.01), in f32 on the VPU
    h = jnp.where(h >= 0, h, 0.01 * h)
    # Linear 2 (cast activations to bf16 for the MXU, f32 accumulate).
    # Padded output lanes (if any) carry a -1e30 bias -> they vanish in the softmax.
    z = jnp.dot(h.astype(w2_ref.dtype), w2_ref[...], preferred_element_type=jnp.float32)
    z = z + b2_ref[...]
    # Numerically stable softmax over the feature (lane) axis. Exact divide so rows
    # sum to 1 to f32 precision (reciprocal/divide runs on the EUP, off the VALU).
    z = z - jnp.max(z, axis=-1, keepdims=True)
    e = jnp.exp(z)
    denom = jnp.sum(e, axis=-1, keepdims=True)
    o_ref[...] = (e / denom).astype(o_ref.dtype)


def nn_forward(x, w1, b1, w2, b2):
    """Forward pass of NN: Linear -> LeakyReLU -> Linear -> Softmax(dim=1).

    x:  [B, inp_size]
    w1: [inp_size, hidden_size], b1: [1, hidden_size]   (torch weight transposed)
    w2: [hidden_size, out_size], b2: [1, out_size]
    returns [B, out_size] float32
    """
    B, inp = x.shape
    hid = w1.shape[1]
    out = w2.shape[1]

    # Lane-dense output width (unmasked stores). Only the output/N side is padded.
    OUT_P = _round_up(out, 128)

    # Batch tile: run the whole batch in at most two fat tiles (one per v7x TC),
    # capped at 512 rows. bf16 packs 2 rows per sublane -> 16-row granularity.
    MAX_TB = 512
    if B <= 16:
        TB = 16
    elif B <= 2 * MAX_TB:
        TB = _round_up((B + 1) // 2, 16)
    else:
        TB = MAX_TB
    B_pad = _round_up(B, TB)
    grid = (B_pad // TB,)

    # x / w1 / b1 at natural sizes (no HBM padding round trips); only batch-pad x
    # if B is not already a multiple of the tile.
    x_b = x.astype(jnp.bfloat16)
    if B_pad != B:
        x_b = jnp.pad(x_b, ((0, B_pad - B), (0, 0)))
    w1_b = w1.astype(jnp.bfloat16)
    b1_f = b1.astype(jnp.float32).reshape(1, hid)

    if OUT_P != out:
        # Tiny pads; padded bias lanes get -1e30 so they contribute 0 to the softmax.
        w2_b = jnp.zeros((hid, OUT_P), jnp.bfloat16).at[:, :out].set(w2.astype(jnp.bfloat16))
        b2_f = jnp.full((1, OUT_P), -1e30, jnp.float32).at[:, :out].set(
            b2.astype(jnp.float32).reshape(1, out))
    else:
        w2_b = w2.astype(jnp.bfloat16)
        b2_f = b2.astype(jnp.float32).reshape(1, out)

    flops = 2 * B_pad * (inp * hid + hid * OUT_P)
    transcendentals = B_pad * OUT_P + B_pad  # exp + reciprocal/divide
    bytes_accessed = (
        x_b.size * 2 + w1_b.size * 2 + w2_b.size * 2
        + b1_f.size * 4 + b2_f.size * 4 + B_pad * OUT_P * 4
    )

    out_pad = pl.pallas_call(
        mlp_softmax_kernel,
        out_shape=jax.ShapeDtypeStruct((B_pad, OUT_P), jnp.float32),
        grid_spec=pltpu.PrefetchScalarGridSpec(
            num_scalar_prefetch=0,
            grid=grid,
            in_specs=[
                pl.BlockSpec((TB, inp), lambda i: (i, 0)),      # x tile, pipelined
                pl.BlockSpec((inp, hid), lambda i: (0, 0)),     # w1, VMEM-resident
                pl.BlockSpec((1, hid), lambda i: (0, 0)),       # b1, VMEM-resident
                pl.BlockSpec((hid, OUT_P), lambda i: (0, 0)),   # w2, VMEM-resident
                pl.BlockSpec((1, OUT_P), lambda i: (0, 0)),     # b2, VMEM-resident
            ],
            out_specs=pl.BlockSpec((TB, OUT_P), lambda i: (i, 0)),
        ),
        compiler_params=pltpu.CompilerParams(
            dimension_semantics=("parallel",),
        ),
        cost_estimate=pl.CostEstimate(
            flops=flops,
            transcendentals=transcendentals,
            bytes_accessed=bytes_accessed,
        ),
    )(x_b, w1_b, b1_f, w2_b, b2_f)

    if B_pad != B or OUT_P != out:
        out_pad = out_pad[:B, :out]
    return out_pad


def init_params(key, inp_size, hidden_size, out_size):
    """Deterministic torch-nn.Linear-style init: U(-1/sqrt(fan_in), 1/sqrt(fan_in))."""
    k1, k2, k3, k4 = jax.random.split(key, 4)
    bound1 = 1.0 / (inp_size ** 0.5)
    bound2 = 1.0 / (hidden_size ** 0.5)
    w1 = jax.random.uniform(k1, (inp_size, hidden_size), jnp.float32, -bound1, bound1)
    b1 = jax.random.uniform(k2, (1, hidden_size), jnp.float32, -bound1, bound1)
    w2 = jax.random.uniform(k3, (hidden_size, out_size), jnp.float32, -bound2, bound2)
    b2 = jax.random.uniform(k4, (1, out_size), jnp.float32, -bound2, bound2)
    return w1, b1, w2, b2


if __name__ == "__main__":
    # Shapes consistent with the module's forward: x is [batch, inp_size].
    # batch=256 -> two 128-row tiles (one per v7x TensorCore), no batch padding.
    batch, inp_size, hidden_size, out_size = 256, 32, 64, 16

    key = jax.random.PRNGKey(0)
    kx, kp = jax.random.split(key)
    x = jax.random.normal(kx, (batch, inp_size), dtype=jnp.float32)
    w1, b1, w2, b2 = init_params(kp, inp_size, hidden_size, out_size)

    out = nn_forward(x, w1, b1, w2, b2)
    out = jax.block_until_ready(out)

    # Pure-JAX f32 reference (same math path as the torch module).
    h_ref = x @ w1 + b1
    h_ref = jnp.where(h_ref >= 0, h_ref, 0.01 * h_ref)
    z_ref = h_ref @ w2 + b2
    ref = jax.nn.softmax(z_ref, axis=1)

    assert out.shape == (batch, out_size)
    # bf16 matmul inputs -> slightly looser tolerance than pure f32.
    assert jnp.allclose(out, ref, atol=2e-2, rtol=2e-2), float(jnp.max(jnp.abs(out - ref)))
    # Exact divide in the softmax -> rows sum to 1 to f32 precision.
    assert jnp.allclose(jnp.sum(out, axis=1), 1.0, atol=1e-3)

    print("KERNEL_OK")
</pallas_src>

<mosaic_0001>
module attributes {stable_mosaic.version = 11 : i64} {
  func.func @mlp_softmax_kernel(%arg0: i32, %arg1: memref<128x32xbf16, #tpu.memory_space<vmem>>, %arg2: memref<32x64xbf16, #tpu.memory_space<vmem>>, %arg3: memref<1x64xf32, #tpu.memory_space<vmem>>, %arg4: memref<64x128xbf16, #tpu.memory_space<vmem>>, %arg5: memref<1x128xf32, #tpu.memory_space<vmem>>, %arg6: memref<128x128xf32, #tpu.memory_space<vmem>>) attributes {dimension_semantics = [#tpu.dimension_semantics<parallel>], iteration_bounds = array<i64: 2>, scalar_prefetch = 0 : i64, scratch_operands = 0 : i64, tpu.core_type = #tpu.core_type<tc>, window_params = [{transform_indices = @transform_0, window_bounds = array<i64: 128, 32>}, {pipeline_mode = #tpu.pipeline_mode<synchronous>, transform_indices = @transform_1, window_bounds = array<i64: 32, 64>}, {pipeline_mode = #tpu.pipeline_mode<synchronous>, transform_indices = @transform_2, window_bounds = array<i64: 1, 64>}, {pipeline_mode = #tpu.pipeline_mode<synchronous>, transform_indices = @transform_3, window_bounds = array<i64: 64, 128>}, {pipeline_mode = #tpu.pipeline_mode<synchronous>, transform_indices = @transform_4, window_bounds = array<i64: 1, 128>}, {transform_indices = @transform_5, window_bounds = array<i64: 128, 128>}]} {
    %c0 = arith.constant 0 : index
    %c0_0 = arith.constant 0 : index
    %0 = vector.load %arg1[%c0, %c0_0] : memref<128x32xbf16, #tpu.memory_space<vmem>>, vector<128x32xbf16>
    %c0_1 = arith.constant 0 : index
    %c0_2 = arith.constant 0 : index
    %1 = vector.load %arg2[%c0_1, %c0_2] : memref<32x64xbf16, #tpu.memory_space<vmem>>, vector<32x64xbf16>
    %cst = arith.constant dense<0.000000e+00> : vector<128x64xf32>
    %2 = tpu.matmul %0, %1, %cst {dimension_numbers = #tpu.dot_dimension_numbers<[1], [0], [0], [1], [0, 0, 1, 1], [], []>} : vector<128x32xbf16>, vector<32x64xbf16>, vector<128x64xf32> -> vector<128x64xf32>
    %c0_3 = arith.constant 0 : index
    %c0_4 = arith.constant 0 : index
    %3 = vector.load %arg3[%c0_3, %c0_4] : memref<1x64xf32, #tpu.memory_space<vmem>>, vector<1x64xf32>
    %4 = vector.broadcast %3 : vector<1x64xf32> to vector<128x64xf32>
    %5 = arith.addf %2, %4 : vector<128x64xf32>
    %cst_5 = arith.constant 0.000000e+00 : f32
    %6 = vector.broadcast %cst_5 : f32 to vector<128x64xf32>
    %7 = arith.cmpf oge, %5, %6 : vector<128x64xf32>
    %cst_6 = arith.constant 0.00999999977 : f32
    %8 = vector.broadcast %cst_6 : f32 to vector<128x64xf32>
    %9 = arith.mulf %8, %5 : vector<128x64xf32>
    %10 = arith.select %7, %5, %9 : vector<128x64xi1>, vector<128x64xf32>
    %11 = arith.truncf %10 : vector<128x64xf32> to vector<128x64xbf16>
    %c0_7 = arith.constant 0 : index
    %c0_8 = arith.constant 0 : index
    %12 = vector.load %arg4[%c0_7, %c0_8] : memref<64x128xbf16, #tpu.memory_space<vmem>>, vector<64x128xbf16>
    %cst_9 = arith.constant dense<0.000000e+00> : vector<128x128xf32>
    %13 = tpu.matmul %11, %12, %cst_9 {dimension_numbers = #tpu.dot_dimension_numbers<[1], [0], [0], [1], [0, 0, 1, 1], [], []>} : vector<128x64xbf16>, vector<64x128xbf16>, vector<128x128xf32> -> vector<128x128xf32>
    %c0_10 = arith.constant 0 : index
    %c0_11 = arith.constant 0 : index
    %14 = vector.load %arg5[%c0_10, %c0_11] : memref<1x128xf32, #tpu.memory_space<vmem>>, vector<1x128xf32>
    %15 = vector.broadcast %14 : vector<1x128xf32> to vector<128x128xf32>
    %16 = arith.addf %13, %15 : vector<128x128xf32>
    %cst_12 = arith.constant dense<0xFF800000> : vector<128xf32>
    %17 = vector.multi_reduction <maximumf>, %16, %cst_12 [1] : vector<128x128xf32> to vector<128xf32>
    %18 = vector.shape_cast %17 : vector<128xf32> to vector<128x1xf32>
    %19 = vector.broadcast %18 : vector<128x1xf32> to vector<128x128xf32>
    %20 = arith.subf %16, %19 : vector<128x128xf32>
    %21 = math.exp %20 : vector<128x128xf32>
    %cst_13 = arith.constant dense<0.000000e+00> : vector<128xf32>
    %22 = vector.multi_reduction <add>, %21, %cst_13 [1] : vector<128x128xf32> to vector<128xf32>
    %23 = vector.shape_cast %22 : vector<128xf32> to vector<128x1xf32>
    %24 = vector.broadcast %23 : vector<128x1xf32> to vector<128x128xf32>
    %25 = arith.divf %21, %24 : vector<128x128xf32>
    %c0_14 = arith.constant 0 : index
    %c0_15 = arith.constant 0 : index
    %26 = vector.load %arg6[%c0_14, %c0_15] : memref<128x128xf32, #tpu.memory_space<vmem>>, vector<128x128xf32>
    tpu.vector_store %arg6[%c0_14, %c0_15], %25 {strides = array<i32>} : memref<128x128xf32, #tpu.memory_space<vmem>>, vector<128x128xf32>,
    return
  }
  func.func @transform_0(%arg0: i32) -> (i32, i32) {
    %c0_i32 = arith.constant 0 : i32
    %c0_i32_0 = arith.constant 0 : i32
    return %arg0, %c0_i32 : i32, i32
  }
  func.func @transform_1(%arg0: i32) -> (i32, i32) {
    %c0_i32 = arith.constant 0 : i32
    %c0_i32_0 = arith.constant 0 : i32
    %c0_i32_1 = arith.constant 0 : i32
    return %c0_i32, %c0_i32_0 : i32, i32
  }
  func.func @transform_2(%arg0: i32) -> (i32, i32) {
    %c0_i32 = arith.constant 0 : i32
    %c0_i32_0 = arith.constant 0 : i32
    %c0_i32_1 = arith.constant 0 : i32
    return %c0_i32, %c0_i32_0 : i32, i32
  }
  func.func @transform_3(%arg0: i32) -> (i32, i32) {
    %c0_i32 = arith.constant 0 : i32
    %c0_i32_0 = arith.constant 0 : i32
    %c0_i32_1 = arith.constant 0 : i32
    return %c0_i32, %c0_i32_0 : i32, i32
  }
  func.func @transform_4(%arg0: i32) -> (i32, i32) {
    %c0_i32 = arith.constant 0 : i32
    %c0_i32_0 = arith.constant 0 : i32
    %c0_i32_1 = arith.constant 0 : i32
    return %c0_i32, %c0_i32_0 : i32, i32
  }
  func.func @transform_5(%arg0: i32) -> (i32, i32) {
    %c0_i32 = arith.constant 0 : i32
    %c0_i32_0 = arith.constant 0 : i32
    return %arg0, %c0_i32 : i32, i32
  }
}

</mosaic_0001>

<llo_original>
// kernel: tpu_custom_call.1
$region0: #{tpu_custom_call.1}
  #allocation0 [shape = 'u32[]', space=smem, size = 0x4, offset = 0x4, fixed_abs, tag = 'smem constant byte address 0x4 - core index']
  #allocation1 [shape = 'u32[144,128]{1,0:T(1,128)}', space=vmem, size = 0x12000, scoped, tag = 'internal scratch']
  %s0 = inlined_call_operand.vmem [shape: bf16[256,32], index: 0, kind: input, shape index: {}]
  %s1 = inlined_call_operand.vmem [shape: bf16[32,64], index: 1, kind: input, shape index: {}]
  %s2 = inlined_call_operand.vmem [shape: f32[1,64], index: 2, kind: input, shape index: {}]
  %s3 = inlined_call_operand.vmem [shape: bf16[64,128], index: 3, kind: input, shape index: {}]
  %s4 = inlined_call_operand.vmem [shape: f32[1,128], index: 4, kind: input, shape index: {}]
  %s5 = inlined_call_operand.hbm [shape: f32[256,128], index: 5, kind: output, shape index: {}]
  %s6 = sld [smem:[#allocation0]]
  $region53: #{tpu_custom_call.1} parent=0
    _
  %s8 = ssub.s32 1, %s6
  %s9 = scalar_select 0, %s8, %s6
  $region1: #{tpu_custom_call.1} parent=0
    #allocation2 [shape = 'u8[131072]{0}', space=vmem, size = 0x20000, scoped, tag = 'output window, operand 0']
    #allocation3 [shape = 's32[2]{0}', space=sflag, size = 0x8, scoped, tag = 'scoped memory for tpu_custom_call.1']
    %10 = vsyncpa [#allocation3], 0
    %s11 = scalar_lea.sflag [#allocation3], 1
    %12 = vsyncpa %s11, 0
    loop: start=0, step=1, limit=4
    $region2: #{tpu_custom_call.1} parent=1 // loop_pre_header
      _
    $region3: #{tpu_custom_call.1} parent=1 // loop_header
      %s14 = sphi 0, %s18
      %p15 = scmp.ge.s32.totalorder %s14, 4
      %s24 = sphi 0, %s26
      %s27 = sphi 0, %s24
      %s28 = sphi 0, %s27
      %s44 = sphi 0, %s28
      %s48 = sphi 0, %s48
      %s50 = sphi 0, %s48
      %s51 = sphi 0, %s50
      %s65 = sphi 0, %s51
      %s69 = sphi 0, %s69
      %s71 = sphi 0, %s69
      %s72 = sphi 0, %s71
      %s86 = sphi 0, %s72
      %s90 = sphi 0, %s90
      %s92 = sphi 0, %s90
      %s93 = sphi 0, %s92
      %s107 = sphi 0, %s93
      %s111 = sphi 0, %s111
      %s113 = sphi 0, %s111
      %s114 = sphi 0, %s113
      %s128 = sphi 0, %s114
      %s134 = sphi 0, %s136
      %s137 = sphi 0, %s134
      %s138 = sphi 0, %s137
      %s154 = sphi 0, %s138
    $region4: #{tpu_custom_call.1} parent=1 // loop_header_branch
      %17 = sbr.rel (%p15) target = $region8
    $region5: #{tpu_custom_call.1} parent=1 // loop_body
      %s19 = ssub.s32 %s14, 1
      %s20 = ssub.s32 %s14, 2
      %s21 = sadd.s32 %s14, 1
      %s22 = ssub.s32 %s14, %s21
      %p23 = scmp.eq.s32.totalorder %s22, 0
      %s25 = sadd.s32 %s24, 1
      %s26 = scalar_select %p23, %s24, %s25
      %p29 = pneg %p23
      %p30 = scmp.eq.s32.totalorder %s14, 1
      %p31 = por %p29, %p30
      %p32 = scmp.ne.s32.totalorder %s24, %s27
      %p33 = scmp.eq.s32.totalorder %s14, 0
      %p34 = por %p32, %p33
      %p35 = scmp.ne.s32.totalorder %s24, %s27
      %p36 = scmp.eq.s32.totalorder %s19, 1
      %p37 = por %p35, %p36
      %p38 = scmp.ne.s32.totalorder %s27, %s28
      %p39 = scmp.eq.s32.totalorder %s19, 0
      %p40 = por %p38, %p39
      %p41 = scmp.ne.s32.totalorder %s27, %s28
      %p42 = scmp.eq.s32.totalorder %s20, 1
      %p43 = por %p41, %p42
      %p45 = scmp.ne.s32.totalorder %s28, %s44
      %p46 = scmp.eq.s32.totalorder %s20, 0
      %p47 = por %p45, %p46
      %s49 = sadd.s32 %s48, 1
      %p52 = scmp.eq.s32.totalorder %s14, 1
      %p53 = scmp.ne.s32.totalorder %s48, %s50
      %p54 = scmp.eq.s32.totalorder %s14, 0
      %p55 = por %p53, %p54
      %p56 = scmp.ne.s32.totalorder %s48, %s50
      %p57 = scmp.eq.s32.totalorder %s19, 1
      %p58 = por %p56, %p57
      %p59 = scmp.ne.s32.totalorder %s50, %s51
      %p60 = scmp.eq.s32.totalorder %s19, 0
      %p61 = por %p59, %p60
      %p62 = scmp.ne.s32.totalorder %s50, %s51
      %p63 = scmp.eq.s32.totalorder %s20, 1
      %p64 = por %p62, %p63
      %p66 = scmp.ne.s32.totalorder %s51, %s65
      %p67 = scmp.eq.s32.totalorder %s20, 0
      %p68 = por %p66, %p67
      %s70 = sadd.s32 %s69, 1
      %p73 = scmp.eq.s32.totalorder %s14, 1
      %p74 = scmp.ne.s32.totalorder %s69, %s71
      %p75 = scmp.eq.s32.totalorder %s14, 0
      %p76 = por %p74, %p75
      %p77 = scmp.ne.s32.totalorder %s69, %s71
      %p78 = scmp.eq.s32.totalorder %s19, 1
      %p79 = por %p77, %p78
      %p80 = scmp.ne.s32.totalorder %s71, %s72
      %p81 = scmp.eq.s32.totalorder %s19, 0
      %p82 = por %p80, %p81
      %p83 = scmp.ne.s32.totalorder %s71, %s72
      %p84 = scmp.eq.s32.totalorder %s20, 1
      %p85 = por %p83, %p84
      %p87 = scmp.ne.s32.totalorder %s72, %s86
      %p88 = scmp.eq.s32.totalorder %s20, 0
      %p89 = por %p87, %p88
      %s91 = sadd.s32 %s90, 1
      %p94 = scmp.eq.s32.totalorder %s14, 1
      %p95 = scmp.ne.s32.totalorder %s90, %s92
      %p96 = scmp.eq.s32.totalorder %s14, 0
      %p97 = por %p95, %p96
      %p98 = scmp.ne.s32.totalorder %s90, %s92
      %p99 = scmp.eq.s32.totalorder %s19, 1
      %p100 = por %p98, %p99
      %p101 = scmp.ne.s32.totalorder %s92, %s93
      %p102 = scmp.eq.s32.totalorder %s19, 0
      %p103 = por %p101, %p102
      %p104 = scmp.ne.s32.totalorder %s92, %s93
      %p105 = scmp.eq.s32.totalorder %s20, 1
      %p106 = por %p104, %p105
      %p108 = scmp.ne.s32.totalorder %s93, %s107
      %p109 = scmp.eq.s32.totalorder %s20, 0
      %p110 = por %p108, %p109
      %s112 = sadd.s32 %s111, 1
      %p115 = scmp.eq.s32.totalorder %s14, 1
      %p116 = scmp.ne.s32.totalorder %s111, %s113
      %p117 = scmp.eq.s32.totalorder %s14, 0
      %p118 = por %p116, %p117
      %p119 = scmp.ne.s32.totalorder %s111, %s113
      %p120 = scmp.eq.s32.totalorder %s19, 1
      %p121 = por %p119, %p120
      %p122 = scmp.ne.s32.totalorder %s113, %s114
      %p123 = scmp.eq.s32.totalorder %s19, 0
      %p124 = por %p122, %p123
      %p125 = scmp.ne.s32.totalorder %s113, %s114
      %p126 = scmp.eq.s32.totalorder %s20, 1
      %p127 = por %p125, %p126
      %p129 = scmp.ne.s32.totalorder %s114, %s128
      %p130 = scmp.eq.s32.totalorder %s20, 0
      %p131 = por %p129, %p130
      %s132 = ssub.s32 %s14, %s21
      %p133 = scmp.eq.s32.totalorder %s132, 0
      %s135 = sadd.s32 %s134, 1
      %s136 = scalar_select %p133, %s134, %s135
      %p139 = pneg %p133
      %p140 = scmp.eq.s32.totalorder %s14, 1
      %p141 = por %p139, %p140
      %p142 = scmp.ne.s32.totalorder %s134, %s137
      %p143 = scmp.eq.s32.totalorder %s14, 0
      %p144 = por %p142, %p143
      %p145 = scmp.ne.s32.totalorder %s134, %s137
      %p146 = scmp.eq.s32.totalorder %s19, 1
      %p147 = por %p145, %p146
      %p148 = scmp.ne.s32.totalorder %s137, %s138
      %p149 = scmp.eq.s32.totalorder %s19, 0
      %p150 = por %p148, %p149
      %p151 = scmp.ne.s32.totalorder %s137, %s138
      %p152 = scmp.eq.s32.totalorder %s20, 1
      %p153 = por %p151, %p152
      %p155 = scmp.ne.s32.totalorder %s138, %s154
      %p156 = scmp.eq.s32.totalorder %s20, 0
      %p157 = por %p155, %p156
      %p158 = scmp.le.s32.totalorder 1, %s14
      %p159 = scmp.lt.s32.totalorder %s14, 3
      %p160 = pnand %p158, %p159
      %p161 = pneg %p160
      // Predicated region
      $region9: #{tpu_custom_call.1} parent=5 // pred_check
        _
      $region10: #{tpu_custom_call.1} parent=5 // pred_check_branch
        %163 = sbr.rel (%p160) target = $region12
      $region11: #{tpu_custom_call.1} parent=5 // pred_region
        %s164 = ssub.s32 %s14, 1
        // Predicated region
        $region13: #{tpu_custom_call.1} parent=11 // pred_check
          %p165 = pneg %p61
        $region14: #{tpu_custom_call.1} parent=11 // pred_check_branch
          %167 = sbr.rel (%p165) target = $region16
        $region15: #{tpu_custom_call.1} parent=11 // pred_region
          _
        $region16: #{tpu_custom_call.1} parent=11 // pred_fallthru
          _
        // Predicated region
        $region17: #{tpu_custom_call.1} parent=11 // pred_check
          %p168 = pneg %p82
        $region18: #{tpu_custom_call.1} parent=11 // pred_check_branch
          %170 = sbr.rel (%p168) target = $region20
        $region19: #{tpu_custom_call.1} parent=11 // pred_region
          _
        $region20: #{tpu_custom_call.1} parent=11 // pred_fallthru
          _
        // Predicated region
        $region21: #{tpu_custom_call.1} parent=11 // pred_check
          %p171 = pneg %p103
        $region22: #{tpu_custom_call.1} parent=11 // pred_check_branch
          %173 = sbr.rel (%p171) target = $region24
        $region23: #{tpu_custom_call.1} parent=11 // pred_region
          _
        $region24: #{tpu_custom_call.1} parent=11 // pred_fallthru
          _
        // Predicated region
        $region25: #{tpu_custom_call.1} parent=11 // pred_check
          %p174 = pneg %p124
        $region26: #{tpu_custom_call.1} parent=11 // pred_check_branch
          %176 = sbr.rel (%p174) target = $region28
        $region27: #{tpu_custom_call.1} parent=11 // pred_region
          _
        $region28: #{tpu_custom_call.1} parent=11 // pred_fallthru
          _
      $region12: #{tpu_custom_call.1} parent=5 // pred_fallthru
        _
      %p177 = scmp.lt.s32.totalorder %s14, 2
      // Predicated region
      $region29: #{tpu_custom_call.1} parent=5 // pred_check
        %p178 = pneg %p177
      $region30: #{tpu_custom_call.1} parent=5 // pred_check_branch
        %180 = sbr.rel (%p178) target = $region32
      $region31: #{tpu_custom_call.1} parent=5 // pred_region
        // Predicated region
        $region33: #{tpu_custom_call.1} parent=31 // pred_check
          %p181 = pneg %p34
        $region34: #{tpu_custom_call.1} parent=31 // pred_check_branch
          %183 = sbr.rel (%p181) target = $region36
        $region35: #{tpu_custom_call.1} parent=31 // pred_region
          %s184 = smul.u32 16, %s14
          %p185 = scmp.lt.s32.totalorder %s184, 31
          %s186 = scalar_select %p185, %s184, 31
          %s187 = smul.addr %s186, 4
          %s188 = scalar_lea.vmem %s0, %s187
          %s189 = smul.u32 16, %s14
        $region36: #{tpu_custom_call.1} parent=31 // pred_fallthru
          _
      $region32: #{tpu_custom_call.1} parent=5 // pred_fallthru
        _
      %p190 = scmp.le.s32.totalorder 1, %s14
      %p191 = scmp.lt.s32.totalorder %s14, 3
      %p192 = pnand %p190, %p191
      %p193 = pneg %p192
      // Predicated region
      $region37: #{tpu_custom_call.1} parent=5 // pred_check
        _
      $region38: #{tpu_custom_call.1} parent=5 // pred_check_branch
        %195 = sbr.rel (%p192) target = $region40
      $region39: #{tpu_custom_call.1} parent=5 // pred_region
        %s196 = ssub.s32 %s14, 1
        %s197 = smul.u32 16, %s19
        %p198 = scmp.lt.s32.totalorder %s197, 31
        %s199 = scalar_select %p198, %s197, 31
        %s200 = smul.addr %s199, 4
        %s201 = scalar_lea.vmem %s0, %s200
        %p202 = pneg %p40
        %p203 = pneg %p37
        %p204 = pneg %p61
        %p205 = pneg %p58
        %p206 = pneg %p82
        %p207 = pneg %p79
        %p208 = pneg %p103
        %p209 = pneg %p100
        %p210 = pneg %p124
        %p211 = pneg %p121
        %p212 = pneg %p150
        %p213 = pneg %p147
        %s214 = sand.u32 %s137, 1
        %s215 = scalar_lea.sflag [#allocation3], %s214
        %s216 = sand.u32 %s137, 1
        %s217 = smul.addr %s216, 128
        %s218 = scalar_lea.vmem [#allocation2], %s217
        %s219 = smul.u32 16, %s19
        %p220 = scmp.lt.s32.totalorder %s219, 31
        %s221 = scalar_select %p220, %s219, 31
        %s222 = smul.addr %s221, 4
        %s223 = scalar_lea.vmem %s0, %s222
        %s224 = smul.u32 16, %s19
        %s225 = smul.u32 16, %s19
        %v227 = vld [vmem:[%s223] sm:$0xf]
        %v228 = vld [vmem:[%s223 + $0x4] sm:$0xf]
        %v229 = vld [vmem:[%s223 + $0x8] sm:$0xf]
        %v230 = vld [vmem:[%s223 + $0xc] sm:$0xf]
        %v231 = vld [vmem:[%s223 + $0x10] sm:$0xf]
        %v232 = vld [vmem:[%s223 + $0x14] sm:$0xf]
        %v233 = vld [vmem:[%s223 + $0x18] sm:$0xf]
        %v234 = vld [vmem:[%s223 + $0x1c] sm:$0xf]
        %v235 = vld [vmem:[%s223 + $0x20] sm:$0xf]
        %v236 = vld [vmem:[%s223 + $0x24] sm:$0xf]
        %v237 = vld [vmem:[%s223 + $0x28] sm:$0xf]
        %v238 = vld [vmem:[%s223 + $0x2c] sm:$0xf]
        %v239 = vld [vmem:[%s223 + $0x30] sm:$0xf]
        %v240 = vld [vmem:[%s223 + $0x34] sm:$0xf]
        %v241 = vld [vmem:[%s223 + $0x38] sm:$0xf]
        %v242 = vld [vmem:[%s223 + $0x3c] sm:$0xf]
        %v243 = vld [vmem:[%s1] sm:$0xf]
        %v244 = vld [vmem:[%s1 + $0x4] sm:$0xf]
        %v245 = vld [vmem:[%s1 + $0x8] sm:$0xf]
        %v246 = vld [vmem:[%s1 + $0xc] sm:$0xf]
        %v247 = vld [vmem:[%s2] sm:$0x1]
        %v249 = vlaneseq
        %v250 = vshrl.u32 %v249, 7
        %v251 = vsub.s32 0, %v250
        %v252 = vrot.slane %v247, %v251
        %v270 = vunpack.c.l.b16 %v227
        %v271 = vunpack.c.l.b16 %v228
        %v272 = vunpack.c.l.b16 %v229
        %v273 = vunpack.c.l.b16 %v230
        %v274 = vunpack.c.l.b16 %v231
        %v275 = vunpack.c.l.b16 %v232
        %v276 = vunpack.c.l.b16 %v233
        %v277 = vunpack.c.l.b16 %v234
        %v278 = vunpack.c.l.b16 %v235
        %v279 = vunpack.c.l.b16 %v236
        %v280 = vunpack.c.l.b16 %v237
        %v281 = vunpack.c.l.b16 %v238
        %v282 = vunpack.c.l.b16 %v239
        %v283 = vunpack.c.l.b16 %v240
        %v284 = vunpack.c.l.b16 %v241
        %v285 = vunpack.c.l.b16 %v242
        %v286 = vpack.c.b16 %v271, %v270
        %v287 = vpack.c.b16 %v273, %v272
        %v288 = vpack.c.b16 %v275, %v274
        %v289 = vpack.c.b16 %v277, %v276
        %v290 = vpack.c.b16 %v279, %v278
        %v291 = vpack.c.b16 %v281, %v280
        %v292 = vpack.c.b16 %v283, %v282
        %v293 = vpack.c.b16 %v285, %v284
        %v298 = vunpack.c.l.b16 %v243
        %v299 = vunpack.c.l.b16 %v244
        %v300 = vunpack.c.l.b16 %v245
        %v301 = vunpack.c.l.b16 %v246
        %v302 = vpack.c.b16 %v299, %v298
        %v303 = vpack.c.b16 %v301, %v300
        %vm306 = vcmask 261120
        %v308 = vsel %vm306, %v286, 0
        %v311 = vsel %vm306, %v287, 0
        %v314 = vsel %vm306, %v288, 0
        %v317 = vsel %vm306, %v289, 0
        %v320 = vsel %vm306, %v290, 0
        %v323 = vsel %vm306, %v291, 0
        %v326 = vsel %vm306, %v292, 0
        %v329 = vsel %vm306, %v293, 0
        %331 = vmatprep.subr.bf16.mxu0 0
        %332 = vmatpush1.bf16.msra.mxu0 %v302
        %333 = vmatprep.subr.bf16.mxu0 0
        %334 = vmatpush1.bf16.msra.mxu0 %v303
        %335 = vmatprep.subr.bf16.mxu0 0
        %336 = vmatpush1.bf16.msra.mxu0 0
        %337 = vmatprep.subr.bf16.mxu0 0
        %338 = vmatpush1.bf16.msra.mxu0 0
        %339 = vmatprep.subr.bf16.mxu0 0
        %340 = vmatpush1.bf16.msra.mxu0 0
        %341 = vmatprep.subr.bf16.mxu0 0
        %342 = vmatpush1.bf16.msra.mxu0 0
        %343 = vmatprep.subr.bf16.mxu0 0
        %344 = vmatpush1.bf16.msra.mxu0 0
        %345 = vmatprep.subr.bf16.mxu0 0
        %346 = vmatpush1.bf16.msra.mxu0 0
        %347 = vmatprep.subr.bf16.mxu0 0
        %348 = vmatpush1.bf16.msra.mxu0 0
        %349 = vmatprep.subr.bf16.mxu0 0
        %350 = vmatpush1.bf16.msra.mxu0 0
        %351 = vmatprep.subr.bf16.mxu0 0
        %352 = vmatpush1.bf16.msra.mxu0 0
        %353 = vmatprep.subr.bf16.mxu0 0
        %354 = vmatpush1.bf16.msra.mxu0 0
        %355 = vmatprep.subr.bf16.mxu0 0
        %356 = vmatpush1.bf16.msra.mxu0 0
        %357 = vmatprep.subr.bf16.mxu0 0
        %358 = vmatpush1.bf16.msra.mxu0 0
        %359 = vmatprep.subr.bf16.mxu0 0
        %360 = vmatpush1.bf16.msra.mxu0 0
        %361 = vmatprep.subr.bf16.mxu0 0
        %362 = vmatpush1.bf16.msra.mxu0 0
        %363 = vmatprep.mubr.bf16.mxu0 0
        %364 = vmatmul.mubr.bf16.gmra.mrb[0].mxu0 %v308
        %v365 = vpop.f32.mrb[0].mxu0
        %v366 = vadd.f32 %v252, %v365
        %v367 = vpop.f32.mrb[0].mxu0
        %v368 = vpop.f32.mrb[0].mxu0
        %v369 = vadd.f32 %v252, %v368
        %v370 = vpop.f32.mrb[0].mxu0
        %371 = vmatprep.mubr.bf16.mxu0 0
        %372 = vmatmul.mubr.bf16.gmra.mrb[0].mxu0 %v311
        %v373 = vpop.f32.mrb[0].mxu0
        %v374 = vadd.f32 %v252, %v373
        %v375 = vpop.f32.mrb[0].mxu0
        %v376 = vpop.f32.mrb[0].mxu0
        %v377 = vadd.f32 %v252, %v376
        %v378 = vpop.f32.mrb[0].mxu0
        %379 = vmatprep.mubr.bf16.mxu0 0
        %380 = vmatmul.mubr.bf16.gmra.mrb[0].mxu0 %v314
        %v381 = vpop.f32.mrb[0].mxu0
        %v382 = vadd.f32 %v252, %v381
        %v383 = vpop.f32.mrb[0].mxu0
        %v384 = vpop.f32.mrb[0].mxu0
        %v385 = vadd.f32 %v252, %v384
        %v386 = vpop.f32.mrb[0].mxu0
        %387 = vmatprep.mubr.bf16.mxu0 0
        %388 = vmatmul.mubr.bf16.gmra.mrb[0].mxu0 %v317
        %v389 = vpop.f32.mrb[0].mxu0
        %v390 = vadd.f32 %v252, %v389
        %v391 = vpop.f32.mrb[0].mxu0
        %v392 = vpop.f32.mrb[0].mxu0
        %v393 = vadd.f32 %v252, %v392
        %v394 = vpop.f32.mrb[0].mxu0
        %395 = vmatprep.mubr.bf16.mxu0 0
        %396 = vmatmul.mubr.bf16.gmra.mrb[0].mxu0 %v320
        %v397 = vpop.f32.mrb[0].mxu0
        %v398 = vadd.f32 %v252, %v397
        %v399 = vpop.f32.mrb[0].mxu0
        %v400 = vpop.f32.mrb[0].mxu0
        %v401 = vadd.f32 %v252, %v400
        %v402 = vpop.f32.mrb[0].mxu0
        %403 = vmatprep.mubr.bf16.mxu0 0
        %404 = vmatmul.mubr.bf16.gmra.mrb[0].mxu0 %v323
        %v405 = vpop.f32.mrb[0].mxu0
        %v406 = vadd.f32 %v252, %v405
        %v407 = vpop.f32.mrb[0].mxu0
        %v408 = vpop.f32.mrb[0].mxu0
        %v409 = vadd.f32 %v252, %v408
        %v410 = vpop.f32.mrb[0].mxu0
        %411 = vmatprep.mubr.bf16.mxu0 0
        %412 = vmatmul.mubr.bf16.gmra.mrb[0].mxu0 %v326
        %v413 = vpop.f32.mrb[0].mxu0
        %v414 = vadd.f32 %v252, %v413
        %v415 = vpop.f32.mrb[0].mxu0
        %v416 = vpop.f32.mrb[0].mxu0
        %v417 = vadd.f32 %v252, %v416
        %v418 = vpop.f32.mrb[0].mxu0
        %419 = vmatprep.mubr.bf16.mxu0 0
        %420 = vmatmul.mubr.bf16.gmra.mrb[0].mxu0 %v329
        %v421 = vpop.f32.mrb[0].mxu0
        %v422 = vadd.f32 %v252, %v421
        %v423 = vpop.f32.mrb[0].mxu0
        %v424 = vpop.f32.mrb[0].mxu0
        %v425 = vadd.f32 %v252, %v424
        %v426 = vpop.f32.mrb[0].mxu0
        %427 = vdwg.mxu0
        %vm428 = vcmp.ge.f32.partialorder %v366, 0.0
        %vm429 = vcmp.ge.f32.partialorder %v369, 0.0
        %vm430 = vcmp.ge.f32.partialorder %v374, 0.0
        %vm431 = vcmp.ge.f32.partialorder %v377, 0.0
        %vm432 = vcmp.ge.f32.partialorder %v382, 0.0
        %vm433 = vcmp.ge.f32.partialorder %v385, 0.0
        %vm434 = vcmp.ge.f32.partialorder %v390, 0.0
        %vm435 = vcmp.ge.f32.partialorder %v393, 0.0
        %vm436 = vcmp.ge.f32.partialorder %v398, 0.0
        %vm437 = vcmp.ge.f32.partialorder %v401, 0.0
        %vm438 = vcmp.ge.f32.partialorder %v406, 0.0
        %vm439 = vcmp.ge.f32.partialorder %v409, 0.0
        %vm440 = vcmp.ge.f32.partialorder %v414, 0.0
        %vm441 = vcmp.ge.f32.partialorder %v417, 0.0
        %vm442 = vcmp.ge.f32.partialorder %v422, 0.0
        %vm443 = vcmp.ge.f32.partialorder %v425, 0.0
        %v444 = vmul.f32 %v366, 0.01
        %v445 = vmul.f32 %v369, 0.01
        %v446 = vmul.f32 %v374, 0.01
        %v447 = vmul.f32 %v377, 0.01
        %v448 = vmul.f32 %v382, 0.01
        %v449 = vmul.f32 %v385, 0.01
        %v450 = vmul.f32 %v390, 0.01
        %v451 = vmul.f32 %v393, 0.01
        %v452 = vmul.f32 %v398, 0.01
        %v453 = vmul.f32 %v401, 0.01
        %v454 = vmul.f32 %v406, 0.01
        %v455 = vmul.f32 %v409, 0.01
        %v456 = vmul.f32 %v414, 0.01
        %v457 = vmul.f32 %v417, 0.01
        %v458 = vmul.f32 %v422, 0.01
        %v459 = vmul.f32 %v425, 0.01
        %v460 = vsel %vm428, %v366, %v444
        %v461 = vsel %vm429, %v369, %v445
        %v462 = vsel %vm430, %v374, %v446
        %v463 = vsel %vm431, %v377, %v447
        %v464 = vsel %vm432, %v382, %v448
        %v465 = vsel %vm433, %v385, %v449
        %v466 = vsel %vm434, %v390, %v450
        %v467 = vsel %vm435, %v393, %v451
        %v468 = vsel %vm436, %v398, %v452
        %v469 = vsel %vm437, %v401, %v453
        %v470 = vsel %vm438, %v406, %v454
        %v471 = vsel %vm439, %v409, %v455
        %v472 = vsel %vm440, %v414, %v456
        %v473 = vsel %vm441, %v417, %v457
        %v474 = vsel %vm442, %v422, %v458
        %v475 = vsel %vm443, %v425, %v459
        %v476 = vpack.c.bf16 %v461, %v460
        %v477 = vpack.c.bf16 %v463, %v462
        %v478 = vpack.c.bf16 %v465, %v464
        %v479 = vpack.c.bf16 %v467, %v466
        %v480 = vpack.c.bf16 %v469, %v468
        %v481 = vpack.c.bf16 %v471, %v470
        %v482 = vpack.c.bf16 %v473, %v472
        %v483 = vpack.c.bf16 %v475, %v474
        %v484 = vld [vmem:[%s3] sm:$0xf]
        %v485 = vld [vmem:[%s3 + $0x4] sm:$0xf]
        %v486 = vld [vmem:[%s3 + $0x8] sm:$0xf]
        %v487 = vld [vmem:[%s3 + $0xc] sm:$0xf]
        %v488 = vld [vmem:[%s3 + $0x10] sm:$0xf]
        %v489 = vld [vmem:[%s3 + $0x14] sm:$0xf]
        %v490 = vld [vmem:[%s3 + $0x18] sm:$0xf]
        %v491 = vld [vmem:[%s3 + $0x1c] sm:$0xf]
        %v492 = vld [vmem:[%s4] sm:$0x1]
        %v494 = vlaneseq
        %v495 = vshrl.u32 %v494, 7
        %v496 = vsub.s32 0, %v495
        %v497 = vrot.slane %v492, %v496
        %v507 = vunpack.c.l.b16 %v484
        %v508 = vunpack.c.l.b16 %v485
        %v509 = vunpack.c.l.b16 %v486
        %v510 = vunpack.c.l.b16 %v487
        %v511 = vunpack.c.l.b16 %v488
        %v512 = vunpack.c.l.b16 %v489
        %v513 = vunpack.c.l.b16 %v490
        %v514 = vunpack.c.l.b16 %v491
        %v515 = vpack.c.b16 %v508, %v507
        %v516 = vpack.c.b16 %v510, %v509
        %v517 = vpack.c.b16 %v512, %v511
        %v518 = vpack.c.b16 %v514, %v513
        %vm523 = vcmask 523264
        %v525 = vsel %vm523, %v476, 0
        %v528 = vsel %vm523, %v477, 0
        %v531 = vsel %vm523, %v478, 0
        %v534 = vsel %vm523, %v479, 0
        %v537 = vsel %vm523, %v480, 0
        %v540 = vsel %vm523, %v481, 0
        %v543 = vsel %vm523, %v482, 0
        %v546 = vsel %vm523, %v483, 0
        %548 = vmatprep.subr.bf16.mxu0 0
        %549 = vmatpush1.bf16.msra.mxu0 %v515
        %550 = vmatprep.subr.bf16.mxu0 0
        %551 = vmatpush1.bf16.msra.mxu0 %v516
        %552 = vmatprep.subr.bf16.mxu0 0
        %553 = vmatpush1.bf16.msra.mxu0 %v517
        %554 = vmatprep.subr.bf16.mxu0 0
        %555 = vmatpush1.bf16.msra.mxu0 %v518
        %556 = vmatprep.subr.bf16.mxu0 0
        %557 = vmatpush1.bf16.msra.mxu0 0
        %558 = vmatprep.subr.bf16.mxu0 0
        %559 = vmatpush1.bf16.msra.mxu0 0
        %560 = vmatprep.subr.bf16.mxu0 0
        %561 = vmatpush1.bf16.msra.mxu0 0
        %562 = vmatprep.subr.bf16.mxu0 0
        %563 = vmatpush1.bf16.msra.mxu0 0
        %564 = vmatprep.subr.bf16.mxu0 0
        %565 = vmatpush1.bf16.msra.mxu0 0
        %566 = vmatprep.subr.bf16.mxu0 0
        %567 = vmatpush1.bf16.msra.mxu0 0
        %568 = vmatprep.subr.bf16.mxu0 0
        %569 = vmatpush1.bf16.msra.mxu0 0
        %570 = vmatprep.subr.bf16.mxu0 0
        %571 = vmatpush1.bf16.msra.mxu0 0
        %572 = vmatprep.subr.bf16.mxu0 0
        %573 = vmatpush1.bf16.msra.mxu0 0
        %574 = vmatprep.subr.bf16.mxu0 0
        %575 = vmatpush1.bf16.msra.mxu0 0
        %576 = vmatprep.subr.bf16.mxu0 0
        %577 = vmatpush1.bf16.msra.mxu0 0
        %578 = vmatprep.subr.bf16.mxu0 0
        %579 = vmatpush1.bf16.msra.mxu0 0
        %580 = vmatprep.mubr.bf16.mxu0 0
        %581 = vmatmul.mubr.bf16.gmra.mrb[0].mxu0 %v525
        %v582 = vpop.f32.mrb[0].mxu0
        %v583 = vadd.f32 %v497, %v582
        %v584 = vpop.f32.mrb[0].mxu0
        %v585 = vpop.f32.mrb[0].mxu0
        %v586 = vadd.f32 %v497, %v585
        %v587 = vpop.f32.mrb[0].mxu0
        %588 = vmatprep.mubr.bf16.mxu0 0
        %589 = vmatmul.mubr.bf16.gmra.mrb[0].mxu0 %v528
        %v590 = vpop.f32.mrb[0].mxu0
        %v591 = vadd.f32 %v497, %v590
        %v592 = vpop.f32.mrb[0].mxu0
        %v593 = vpop.f32.mrb[0].mxu0
        %v594 = vadd.f32 %v497, %v593
        %v595 = vpop.f32.mrb[0].mxu0
        %596 = vmatprep.mubr.bf16.mxu0 0
        %597 = vmatmul.mubr.bf16.gmra.mrb[0].mxu0 %v531
        %v598 = vpop.f32.mrb[0].mxu0
        %v599 = vadd.f32 %v497, %v598
        %v600 = vpop.f32.mrb[0].mxu0
        %v601 = vpop.f32.mrb[0].mxu0
        %v602 = vadd.f32 %v497, %v601
        %v603 = vpop.f32.mrb[0].mxu0
        %604 = vmatprep.mubr.bf16.mxu0 0
        %605 = vmatmul.mubr.bf16.gmra.mrb[0].mxu0 %v534
        %v606 = vpop.f32.mrb[0].mxu0
        %v607 = vadd.f32 %v497, %v606
        %v608 = vpop.f32.mrb[0].mxu0
        %v609 = vpop.f32.mrb[0].mxu0
        %v610 = vadd.f32 %v497, %v609
        %v611 = vpop.f32.mrb[0].mxu0
        %612 = vmatprep.mubr.bf16.mxu0 0
        %613 = vmatmul.mubr.bf16.gmra.mrb[0].mxu0 %v537
        %v614 = vpop.f32.mrb[0].mxu0
        %v615 = vadd.f32 %v497, %v614
        %v616 = vpop.f32.mrb[0].mxu0
        %v617 = vpop.f32.mrb[0].mxu0
        %v618 = vadd.f32 %v497, %v617
        %v619 = vpop.f32.mrb[0].mxu0
        %620 = vmatprep.mubr.bf16.mxu0 0
        %621 = vmatmul.mubr.bf16.gmra.mrb[0].mxu0 %v540
        %v622 = vpop.f32.mrb[0].mxu0
        %v623 = vadd.f32 %v497, %v622
        %v624 = vpop.f32.mrb[0].mxu0
        %v625 = vpop.f32.mrb[0].mxu0
        %v626 = vadd.f32 %v497, %v625
        %v627 = vpop.f32.mrb[0].mxu0
        %628 = vmatprep.mubr.bf16.mxu0 0
        %629 = vmatmul.mubr.bf16.gmra.mrb[0].mxu0 %v543
        %v630 = vpop.f32.mrb[0].mxu0
        %v631 = vadd.f32 %v497, %v630
        %v632 = vpop.f32.mrb[0].mxu0
        %v633 = vpop.f32.mrb[0].mxu0
        %v634 = vadd.f32 %v497, %v633
        %v635 = vpop.f32.mrb[0].mxu0
        %636 = vmatprep.mubr.bf16.mxu0 0
        %637 = vmatmul.mubr.bf16.gmra.mrb[0].mxu0 %v546
        %v638 = vpop.f32.mrb[0].mxu0
        %v639 = vadd.f32 %v497, %v638
        %v640 = vpop.f32.mrb[0].mxu0
        %v641 = vpop.f32.mrb[0].mxu0
        %v642 = vadd.f32 %v497, %v641
        %v643 = vpop.f32.mrb[0].mxu0
        %644 = vdwg.mxu0
        %645 = vmax.xlane.f32.xlu0 %v583
        %v646 = vpop.xlane.xlu0 %645
        %647 = vmax.xlane.f32.xlu0 %v586
        %v648 = vpop.xlane.xlu0 %647
        %649 = vmax.xlane.f32.xlu0 %v591
        %v650 = vpop.xlane.xlu0 %649
        %651 = vmax.xlane.f32.xlu0 %v594
        %v652 = vpop.xlane.xlu0 %651
        %653 = vmax.xlane.f32.xlu0 %v599
        %v654 = vpop.xlane.xlu0 %653
        %655 = vmax.xlane.f32.xlu0 %v602
        %v656 = vpop.xlane.xlu0 %655
        %657 = vmax.xlane.f32.xlu0 %v607
        %v658 = vpop.xlane.xlu0 %657
        %659 = vmax.xlane.f32.xlu0 %v610
        %v660 = vpop.xlane.xlu0 %659
        %661 = vmax.xlane.f32.xlu0 %v615
        %v662 = vpop.xlane.xlu0 %661
        %663 = vmax.xlane.f32.xlu0 %v618
        %v664 = vpop.xlane.xlu0 %663
        %665 = vmax.xlane.f32.xlu0 %v623
        %v666 = vpop.xlane.xlu0 %665
        %667 = vmax.xlane.f32.xlu0 %v626
        %v668 = vpop.xlane.xlu0 %667
        %669 = vmax.xlane.f32.xlu0 %v631
        %v670 = vpop.xlane.xlu0 %669
        %671 = vmax.xlane.f32.xlu0 %v634
        %v672 = vpop.xlane.xlu0 %671
        %673 = vmax.xlane.f32.xlu0 %v639
        %v674 = vpop.xlane.xlu0 %673
        %675 = vmax.xlane.f32.xlu0 %v642
        %v676 = vpop.xlane.xlu0 %675
        %v677 = vsub.f32 %v583, %v646
        %v678 = vsub.f32 %v586, %v648
        %v679 = vsub.f32 %v591, %v650
        %v680 = vsub.f32 %v594, %v652
        %v681 = vsub.f32 %v599, %v654
        %v682 = vsub.f32 %v602, %v656
        %v683 = vsub.f32 %v607, %v658
        %v684 = vsub.f32 %v610, %v660
        %v685 = vsub.f32 %v615, %v662
        %v686 = vsub.f32 %v618, %v664
        %v687 = vsub.f32 %v623, %v666
        %v688 = vsub.f32 %v626, %v668
        %v689 = vsub.f32 %v631, %v670
        %v690 = vsub.f32 %v634, %v672
        %v691 = vsub.f32 %v639, %v674
        %v692 = vsub.f32 %v642, %v676
        %v693 = vmul.f32 %v677, 1.442695
        %v694 = vpow.pop %v693
        %v695 = vmul.f32 %v678, 1.442695
        %v696 = vpow.pop %v695
        %v697 = vmul.f32 %v679, 1.442695
        %v698 = vpow.pop %v697
        %v699 = vmul.f32 %v680, 1.442695
        %v700 = vpow.pop %v699
        %v701 = vmul.f32 %v681, 1.442695
        %v702 = vpow.pop %v701
        %v703 = vmul.f32 %v682, 1.442695
        %v704 = vpow.pop %v703
        %v705 = vmul.f32 %v683, 1.442695
        %v706 = vpow.pop %v705
        %v707 = vmul.f32 %v684, 1.442695
        %v708 = vpow.pop %v707
        %v709 = vmul.f32 %v685, 1.442695
        %v710 = vpow.pop %v709
        %v711 = vmul.f32 %v686, 1.442695
        %v712 = vpow.pop %v711
        %v713 = vmul.f32 %v687, 1.442695
        %v714 = vpow.pop %v713
        %v715 = vmul.f32 %v688, 1.442695
        %v716 = vpow.pop %v715
        %v717 = vmul.f32 %v689, 1.442695
        %v718 = vpow.pop %v717
        %v719 = vmul.f32 %v690, 1.442695
        %v720 = vpow.pop %v719
        %v721 = vmul.f32 %v691, 1.442695
        %v722 = vpow.pop %v721
        %v723 = vmul.f32 %v692, 1.442695
        %v724 = vpow.pop %v723
        %725 = vadd.xlane.f32.xlu0 %v694
        %v726 = vpop.xlane.xlu0 %725
        %727 = vadd.xlane.f32.xlu0 %v696
        %v728 = vpop.xlane.xlu0 %727
        %729 = vadd.xlane.f32.xlu0 %v698
        %v730 = vpop.xlane.xlu0 %729
        %731 = vadd.xlane.f32.xlu0 %v700
        %v732 = vpop.xlane.xlu0 %731
        %733 = vadd.xlane.f32.xlu0 %v702
        %v734 = vpop.xlane.xlu0 %733
        %735 = vadd.xlane.f32.xlu0 %v704
        %v736 = vpop.xlane.xlu0 %735
        %737 = vadd.xlane.f32.xlu0 %v706
        %v738 = vpop.xlane.xlu0 %737
        %739 = vadd.xlane.f32.xlu0 %v708
        %v740 = vpop.xlane.xlu0 %739
        %741 = vadd.xlane.f32.xlu0 %v710
        %v742 = vpop.xlane.xlu0 %741
        %743 = vadd.xlane.f32.xlu0 %v712
        %v744 = vpop.xlane.xlu0 %743
        %745 = vadd.xlane.f32.xlu0 %v714
        %v746 = vpop.xlane.xlu0 %745
        %747 = vadd.xlane.f32.xlu0 %v716
        %v748 = vpop.xlane.xlu0 %747
        %749 = vadd.xlane.f32.xlu0 %v718
        %v750 = vpop.xlane.xlu0 %749
        %751 = vadd.xlane.f32.xlu0 %v720
        %v752 = vpop.xlane.xlu0 %751
        %753 = vadd.xlane.f32.xlu0 %v722
        %v754 = vpop.xlane.xlu0 %753
        %755 = vadd.xlane.f32.xlu0 %v724
        %v756 = vpop.xlane.xlu0 %755
        %v757 = vrcp.pop %v726
        %v758 = vmul.f32 %v694, %v757
        %v759 = vrcp.pop %v728
        %v760 = vmul.f32 %v696, %v759
        %v761 = vrcp.pop %v730
        %v762 = vmul.f32 %v698, %v761
        %v763 = vrcp.pop %v732
        %v764 = vmul.f32 %v700, %v763
        %v765 = vrcp.pop %v734
        %v766 = vmul.f32 %v702, %v765
        %v767 = vrcp.pop %v736
        %v768 = vmul.f32 %v704, %v767
        %v769 = vrcp.pop %v738
        %v770 = vmul.f32 %v706, %v769
        %v771 = vrcp.pop %v740
        %v772 = vmul.f32 %v708, %v771
        %v773 = vrcp.pop %v742
        %v774 = vmul.f32 %v710, %v773
        %v775 = vrcp.pop %v744
        %v776 = vmul.f32 %v712, %v775
        %v777 = vrcp.pop %v746
        %v778 = vmul.f32 %v714, %v777
        %v779 = vrcp.pop %v748
        %v780 = vmul.f32 %v716, %v779
        %v781 = vrcp.pop %v750
        %v782 = vmul.f32 %v718, %v781
        %v783 = vrcp.pop %v752
        %v784 = vmul.f32 %v720, %v783
        %v785 = vrcp.pop %v754
        %v786 = vmul.f32 %v722, %v785
        %v787 = vrcp.pop %v756
        %v788 = vmul.f32 %v724, %v787
        %789 = vst [vmem:[%s218] sm:$0xff] %v758
        %790 = vst [vmem:[%s218 + $0x8] sm:$0xff] %v760
        %791 = vst [vmem:[%s218 + $0x10] sm:$0xff] %v762
        %792 = vst [vmem:[%s218 + $0x18] sm:$0xff] %v764
        %793 = vst [vmem:[%s218 + $0x20] sm:$0xff] %v766
        %794 = vst [vmem:[%s218 + $0x28] sm:$0xff] %v768
        %795 = vst [vmem:[%s218 + $0x30] sm:$0xff] %v770
        %796 = vst [vmem:[%s218 + $0x38] sm:$0xff] %v772
        %797 = vst [vmem:[%s218 + $0x40] sm:$0xff] %v774
        %798 = vst [vmem:[%s218 + $0x48] sm:$0xff] %v776
        %799 = vst [vmem:[%s218 + $0x50] sm:$0xff] %v778
        %800 = vst [vmem:[%s218 + $0x58] sm:$0xff] %v780
        %801 = vst [vmem:[%s218 + $0x60] sm:$0xff] %v782
        %802 = vst [vmem:[%s218 + $0x68] sm:$0xff] %v784
        %803 = vst [vmem:[%s218 + $0x70] sm:$0xff] %v786
        %804 = vst [vmem:[%s218 + $0x78] sm:$0xff] %v788
        %s805 = sand.u32 %s137, 1
        %s806 = scalar_lea.sflag [#allocation3], %s805
        %s807 = sand.u32 %s137, 1
        %s808 = smul.addr %s807, 128
        %s809 = scalar_lea.vmem [#allocation2], %s808
        // Predicated region
        $region41: #{tpu_custom_call.1} parent=39 // pred_check
          %p810 = pneg %p147
        $region42: #{tpu_custom_call.1} parent=39 // pred_check_branch
          %812 = sbr.rel (%p810) target = $region44
        $region43: #{tpu_custom_call.1} parent=39 // pred_region
          %s813 = smul.u32 16, %s19
          %s815 = ssub.s32 2048, 2048
          %816 = vsyncadd %s806, %s815
          %s817 = smul.addr %s813, 128
          %s818 = scalar_lea.hbm %s5, %s817
          %s819 = sshll.u32 %s809, 4
          %s820 = int_to_ptr.vmem [resolvable:$true] %s819
          %825 = dma.vmem_to_hbm [thread:$0]  %s820, 2048, %s818, %s806, 128, 128, 8
        $region44: #{tpu_custom_call.1} parent=39 // pred_fallthru
          _
      $region40: #{tpu_custom_call.1} parent=5 // pred_fallthru
        _
      %p826 = scmp.le.s32.totalorder 2, %s14
      // Predicated region
      $region45: #{tpu_custom_call.1} parent=5 // pred_check
        %p827 = pneg %p826
      $region46: #{tpu_custom_call.1} parent=5 // pred_check_branch
        %829 = sbr.rel (%p827) target = $region48
      $region47: #{tpu_custom_call.1} parent=5 // pred_region
        %s830 = ssub.s32 %s14, 2
        // Predicated region
        $region49: #{tpu_custom_call.1} parent=47 // pred_check
          %p831 = pneg %p153
        $region50: #{tpu_custom_call.1} parent=47 // pred_check_branch
          %833 = sbr.rel (%p831) target = $region52
        $region51: #{tpu_custom_call.1} parent=47 // pred_region
          %s834 = sand.u32 %s138, 1
          %s835 = scalar_lea.sflag [#allocation3], %s834
          %s836 = sand.u32 %s138, 1
          %s837 = smul.addr %s836, 128
          %s838 = scalar_lea.vmem [#allocation2], %s837
          %839 = dma.done %s835, 2048
        $region52: #{tpu_custom_call.1} parent=47 // pred_fallthru
          _
      $region48: #{tpu_custom_call.1} parent=5 // pred_fallthru
        _
    $region6: #{tpu_custom_call.1} parent=1 // loop_footer
      %s18 = sadd.s32 1, %s14
    $region7: #{tpu_custom_call.1} parent=1 // loop_footer_branch
      %13 = sbr.rel target = $region3
    $region8: #{tpu_custom_call.1} parent=1 // loop_exit
      _
    %840 = vsyncpa [#allocation3], 1
    %s841 = scalar_lea.sflag [#allocation3], 1
    %842 = vsyncpa %s841, 1

</llo_original>
